<compile_context>
chip_gen: v7x
topology: tpu7x:2x2x1
jax: 0.10.0
libtpu: 0.0.40
codegen_flags: <defaults>
</compile_context>

<pallas_src>
from functools import partial

import jax
import jax.numpy as jnp
from jax import lax
from jax.experimental import pallas as pl
from jax.experimental.pallas import tpu as pltpu


def _lm_head_kernel(eps, h_dim,
                    x_ref, w1_ref, b1_ref, g_ref, beta_ref, w2_ref, b2_ref,
                    o_ref, h_scratch):
    """Grid: (row tiles i, vocab tiles j). Transform cached per row tile."""

    @pl.when(pl.program_id(1) == 0)
    def _transform():
        # ---- dense: x @ W1 + b1 (MXU, native dtype, f32 accumulate) ----
        h = jnp.dot(x_ref[...], w1_ref[...], preferred_element_type=jnp.float32)
        h = h + b1_ref[...].astype(jnp.float32)

        # ---- GELU (tanh approximation), matches nn.GELU(approximate='tanh') ----
        c = 0.7978845608028654  # sqrt(2/pi)
        h = 0.5 * h * (1.0 + jnp.tanh(c * (h + 0.044715 * h * h * h)))

        # ---- LayerNorm over the true hidden dim (padded columns are exactly 0) ----
        inv_h = 1.0 / float(h_dim)
        mean = jnp.sum(h, axis=-1, keepdims=True) * inv_h
        if h_dim != h.shape[-1]:
            # Mask out padded columns so they don't contribute to the variance.
            col = lax.broadcasted_iota(jnp.int32, h.shape, 1)
            d = jnp.where(col < h_dim, h - mean, 0.0)
        else:
            d = h - mean
        var = jnp.sum(d * d, axis=-1, keepdims=True) * inv_h
        hn = (h - mean) * lax.rsqrt(var + eps)
        hn = hn * g_ref[...].astype(jnp.float32) + beta_ref[...].astype(jnp.float32)

        # Cache in the matmul dtype for the decoder (bf16 in production).
        h_scratch[...] = hn.astype(h_scratch.dtype)

    # ---- decoder: h @ W2 + b2 for this (row tile, vocab tile) ----
    y = jnp.dot(h_scratch[...], w2_ref[...], preferred_element_type=jnp.float32)
    y = y + b2_ref[...].astype(jnp.float32)
    o_ref[...] = y.astype(o_ref.dtype)


def _round_up(a, b):
    return (a + b - 1) // b * b


def bert_lm_prediction_head(x, params, *, eps=1e-12, tm=256, tn=2048,
                            vmem_limit_bytes=64 * 1024 * 1024):
    """x: [batch, seq, hidden] -> logits [batch, seq, vocab].

    params (stored [in, out], i.e. transpose of nn.Linear's [out, in]):
      w_dense [H,H], b_dense [1,H], ln_g [1,H], ln_b [1,H], w_dec [H,V], b_dec [1,V]
    """
    B, S, H = x.shape
    V = params["w_dec"].shape[1]
    M = B * S
    x2d = x.reshape(M, H)

    # Lane-dense padding: H, V to multiples of 128; M to the row tile.
    H_pad = _round_up(H, 128)
    tm_eff = min(tm, _round_up(M, 8))
    M_pad = _round_up(M, tm_eff)
    tn_eff = min(tn, _round_up(V, 128))
    V_pad = _round_up(V, tn_eff)

    xp = jnp.pad(x2d, ((0, M_pad - M), (0, H_pad - H)))
    w1 = jnp.pad(params["w_dense"], ((0, H_pad - H), (0, H_pad - H)))
    b1 = jnp.pad(params["b_dense"], ((0, 0), (0, H_pad - H)))
    g  = jnp.pad(params["ln_g"],    ((0, 0), (0, H_pad - H)))
    bt = jnp.pad(params["ln_b"],    ((0, 0), (0, H_pad - H)))
    w2 = jnp.pad(params["w_dec"],   ((0, H_pad - H), (0, V_pad - V)))
    b2 = jnp.pad(params["b_dec"],   ((0, 0), (0, V_pad - V)))

    grid = (M_pad // tm_eff, V_pad // tn_eff)

    out = pl.pallas_call(
        partial(_lm_head_kernel, eps, H),
        out_shape=jax.ShapeDtypeStruct((M_pad, V_pad), x.dtype),
        grid=grid,
        in_specs=[
            pl.BlockSpec((tm_eff, H_pad), lambda i, j: (i, 0)),   # x row tile
            pl.BlockSpec((H_pad, H_pad),  lambda i, j: (0, 0)),   # W_dense (resident)
            pl.BlockSpec((1, H_pad),      lambda i, j: (0, 0)),   # b_dense
            pl.BlockSpec((1, H_pad),      lambda i, j: (0, 0)),   # ln gamma
            pl.BlockSpec((1, H_pad),      lambda i, j: (0, 0)),   # ln beta
            pl.BlockSpec((H_pad, tn_eff), lambda i, j: (0, j)),   # W_decoder vocab tile
            pl.BlockSpec((1, tn_eff),     lambda i, j: (0, j)),   # b_decoder vocab tile
        ],
        out_specs=pl.BlockSpec((tm_eff, tn_eff), lambda i, j: (i, j)),
        scratch_shapes=[pltpu.VMEM((tm_eff, H_pad), x.dtype)],    # cached transform output
        compiler_params=pltpu.CompilerParams(
            dimension_semantics=("parallel", "arbitrary"),
            vmem_limit_bytes=vmem_limit_bytes,
        ),
    )(xp, w1, b1, g, bt, w2, b2)

    return out[:M, :V].reshape(B, S, V)


def _reference(x, params, eps=1e-12):
    h = x.astype(jnp.float32) @ params["w_dense"] + params["b_dense"]
    c = 0.7978845608028654
    h = 0.5 * h * (1.0 + jnp.tanh(c * (h + 0.044715 * h ** 3)))
    mean = jnp.mean(h, axis=-1, keepdims=True)
    var = jnp.mean(jnp.square(h - mean), axis=-1, keepdims=True)
    h = (h - mean) * lax.rsqrt(var + eps) * params["ln_g"] + params["ln_b"]
    return h @ params["w_dec"] + params["b_dec"]


if __name__ == "__main__":
    B, S, H, V = 2, 8, 32, 64  # batch, seq, hidden_size, vocab_size
    key = jax.random.PRNGKey(0)
    k = jax.random.split(key, 8)

    params = {
        # stored as [in, out] (transpose of nn.Linear's [out, in])
        "w_dense": (jax.random.normal(k[0], (H, H), jnp.float32) * 0.02),
        "b_dense": (jax.random.normal(k[1], (1, H), jnp.float32) * 0.02),
        "ln_g":    jnp.ones((1, H), jnp.float32),
        "ln_b":    jnp.zeros((1, H), jnp.float32),
        "w_dec":   (jax.random.normal(k[2], (H, V), jnp.float32) * 0.02),
        "b_dec":   (jax.random.normal(k[3], (1, V), jnp.float32) * 0.02),
    }
    x = jax.random.normal(k[4], (B, S, H), jnp.float32)

    out = bert_lm_prediction_head(x, params)
    out = jax.block_until_ready(out)

    ref = _reference(x, params).reshape(B, S, V)
    assert out.shape == (B, S, V)
    assert jnp.allclose(out, ref, atol=1e-4, rtol=1e-4), "mismatch vs reference"

    print("KERNEL_OK")
</pallas_src>

<mosaic_0001>
module attributes {stable_mosaic.version = 11 : i64} {
  func.func @_lm_head_kernel(%arg0: i32, %arg1: i32, %arg2: memref<16x128xf32, #tpu.memory_space<vmem>>, %arg3: memref<128x128xf32, #tpu.memory_space<vmem>>, %arg4: memref<1x128xf32, #tpu.memory_space<vmem>>, %arg5: memref<1x128xf32, #tpu.memory_space<vmem>>, %arg6: memref<1x128xf32, #tpu.memory_space<vmem>>, %arg7: memref<128x128xf32, #tpu.memory_space<vmem>>, %arg8: memref<1x128xf32, #tpu.memory_space<vmem>>, %arg9: memref<16x128xf32, #tpu.memory_space<vmem>>, %arg10: memref<16x128xf32, #tpu.memory_space<vmem>>) attributes {dimension_semantics = [#tpu.dimension_semantics<parallel>, #tpu.dimension_semantics<arbitrary>], iteration_bounds = array<i64: 1, 1>, scalar_prefetch = 0 : i64, scratch_operands = 1 : i64, tpu.core_type = #tpu.core_type<tc>, window_params = [{transform_indices = @transform_0, window_bounds = array<i64: 16, 128>}, {pipeline_mode = #tpu.pipeline_mode<synchronous>, transform_indices = @transform_1, window_bounds = array<i64: 128, 128>}, {pipeline_mode = #tpu.pipeline_mode<synchronous>, transform_indices = @transform_2, window_bounds = array<i64: 1, 128>}, {pipeline_mode = #tpu.pipeline_mode<synchronous>, transform_indices = @transform_3, window_bounds = array<i64: 1, 128>}, {pipeline_mode = #tpu.pipeline_mode<synchronous>, transform_indices = @transform_4, window_bounds = array<i64: 1, 128>}, {transform_indices = @transform_5, window_bounds = array<i64: 128, 128>}, {transform_indices = @transform_6, window_bounds = array<i64: 1, 128>}, {transform_indices = @transform_7, window_bounds = array<i64: 16, 128>}]} {
    %c0_i32 = arith.constant 0 : i32
    %0 = arith.cmpi eq, %arg1, %c0_i32 : i32
    %1 = arith.extui %0 : i1 to i32
    %c0_i32_0 = arith.constant 0 : i32
    %2 = arith.cmpi ne, %1, %c0_i32_0 : i32
    scf.if %2 {
      %c0_8 = arith.constant 0 : index
      %c0_9 = arith.constant 0 : index
      %10 = vector.load %arg2[%c0_8, %c0_9] : memref<16x128xf32, #tpu.memory_space<vmem>>, vector<16x128xf32>
      %c0_10 = arith.constant 0 : index
      %c0_11 = arith.constant 0 : index
      %11 = vector.load %arg3[%c0_10, %c0_11] : memref<128x128xf32, #tpu.memory_space<vmem>>, vector<128x128xf32>
      %cst_12 = arith.constant dense<0.000000e+00> : vector<16x128xf32>
      %12 = tpu.matmul %10, %11, %cst_12 {dimension_numbers = #tpu.dot_dimension_numbers<[1], [0], [0], [1], [0, 0, 1, 1], [], []>} : vector<16x128xf32>, vector<128x128xf32>, vector<16x128xf32> -> vector<16x128xf32>
      %c0_13 = arith.constant 0 : index
      %c0_14 = arith.constant 0 : index
      %13 = vector.load %arg4[%c0_13, %c0_14] : memref<1x128xf32, #tpu.memory_space<vmem>>, vector<1x128xf32>
      %14 = vector.broadcast %13 : vector<1x128xf32> to vector<16x128xf32>
      %15 = arith.addf %12, %14 : vector<16x128xf32>
      %cst_15 = arith.constant 5.000000e-01 : f32
      %16 = vector.broadcast %cst_15 : f32 to vector<16x128xf32>
      %17 = arith.mulf %16, %15 : vector<16x128xf32>
      %cst_16 = arith.constant 4.471500e-02 : f32
      %18 = vector.broadcast %cst_16 : f32 to vector<16x128xf32>
      %19 = arith.mulf %18, %15 : vector<16x128xf32>
      %20 = arith.mulf %19, %15 : vector<16x128xf32>
      %21 = arith.mulf %20, %15 : vector<16x128xf32>
      %22 = arith.addf %15, %21 : vector<16x128xf32>
      %cst_17 = arith.constant 0.797884583 : f32
      %23 = vector.broadcast %cst_17 : f32 to vector<16x128xf32>
      %24 = arith.mulf %23, %22 : vector<16x128xf32>
      %25 = math.tanh %24 : vector<16x128xf32>
      %cst_18 = arith.constant 1.000000e+00 : f32
      %26 = vector.broadcast %cst_18 : f32 to vector<16x128xf32>
      %27 = arith.addf %26, %25 : vector<16x128xf32>
      %28 = arith.mulf %17, %27 : vector<16x128xf32>
      %cst_19 = arith.constant dense<0.000000e+00> : vector<16xf32>
      %29 = vector.multi_reduction <add>, %28, %cst_19 [1] : vector<16x128xf32> to vector<16xf32>
      %30 = vector.shape_cast %29 : vector<16xf32> to vector<16x1xf32>
      %cst_20 = arith.constant 3.125000e-02 : f32
      %31 = vector.broadcast %cst_20 : f32 to vector<16x1xf32>
      %32 = arith.mulf %30, %31 : vector<16x1xf32>
      %33 = tpu.iota {dimensions = array<i32: 1>} : vector<16x128xi32>
      %c32_i32 = arith.constant 32 : i32
      %34 = vector.broadcast %c32_i32 : i32 to vector<16x128xi32>
      %35 = arith.cmpi slt, %33, %34 : vector<16x128xi32>
      %36 = vector.broadcast %32 : vector<16x1xf32> to vector<16x128xf32>
      %37 = arith.subf %28, %36 : vector<16x128xf32>
      %cst_21 = arith.constant 0.000000e+00 : f32
      %38 = vector.broadcast %cst_21 : f32 to vector<16x128xf32>
      %39 = arith.select %35, %37, %38 : vector<16x128xi1>, vector<16x128xf32>
      %40 = arith.mulf %39, %39 : vector<16x128xf32>
      %cst_22 = arith.constant dense<0.000000e+00> : vector<16xf32>
      %41 = vector.multi_reduction <add>, %40, %cst_22 [1] : vector<16x128xf32> to vector<16xf32>
      %42 = vector.shape_cast %41 : vector<16xf32> to vector<16x1xf32>
      %cst_23 = arith.constant 3.125000e-02 : f32
      %43 = vector.broadcast %cst_23 : f32 to vector<16x1xf32>
      %44 = arith.mulf %42, %43 : vector<16x1xf32>
      %45 = vector.broadcast %32 : vector<16x1xf32> to vector<16x128xf32>
      %46 = arith.subf %28, %45 : vector<16x128xf32>
      %cst_24 = arith.constant 9.99999996E-13 : f32
      %47 = vector.broadcast %cst_24 : f32 to vector<16x1xf32>
      %48 = arith.addf %44, %47 : vector<16x1xf32>
      %49 = math.rsqrt %48 : vector<16x1xf32>
      %50 = vector.broadcast %49 : vector<16x1xf32> to vector<16x128xf32>
      %51 = arith.mulf %46, %50 : vector<16x128xf32>
      %c0_25 = arith.constant 0 : index
      %c0_26 = arith.constant 0 : index
      %52 = vector.load %arg5[%c0_25, %c0_26] : memref<1x128xf32, #tpu.memory_space<vmem>>, vector<1x128xf32>
      %53 = vector.broadcast %52 : vector<1x128xf32> to vector<16x128xf32>
      %54 = arith.mulf %51, %53 : vector<16x128xf32>
      %c0_27 = arith.constant 0 : index
      %c0_28 = arith.constant 0 : index
      %55 = vector.load %arg6[%c0_27, %c0_28] : memref<1x128xf32, #tpu.memory_space<vmem>>, vector<1x128xf32>
      %56 = vector.broadcast %55 : vector<1x128xf32> to vector<16x128xf32>
      %57 = arith.addf %54, %56 : vector<16x128xf32>
      %c0_29 = arith.constant 0 : index
      %c0_30 = arith.constant 0 : index
      %58 = vector.load %arg10[%c0_29, %c0_30] : memref<16x128xf32, #tpu.memory_space<vmem>>, vector<16x128xf32>
      tpu.vector_store %arg10[%c0_29, %c0_30], %57 {strides = array<i32>} : memref<16x128xf32, #tpu.memory_space<vmem>>, vector<16x128xf32>,
    } else {
    }
    %c0 = arith.constant 0 : index
    %c0_1 = arith.constant 0 : index
    %3 = vector.load %arg10[%c0, %c0_1] : memref<16x128xf32, #tpu.memory_space<vmem>>, vector<16x128xf32>
    %c0_2 = arith.constant 0 : index
    %c0_3 = arith.constant 0 : index
    %4 = vector.load %arg7[%c0_2, %c0_3] : memref<128x128xf32, #tpu.memory_space<vmem>>, vector<128x128xf32>
    %cst = arith.constant dense<0.000000e+00> : vector<16x128xf32>
    %5 = tpu.matmul %3, %4, %cst {dimension_numbers = #tpu.dot_dimension_numbers<[1], [0], [0], [1], [0, 0, 1, 1], [], []>} : vector<16x128xf32>, vector<128x128xf32>, vector<16x128xf32> -> vector<16x128xf32>
    %c0_4 = arith.constant 0 : index
    %c0_5 = arith.constant 0 : index
    %6 = vector.load %arg8[%c0_4, %c0_5] : memref<1x128xf32, #tpu.memory_space<vmem>>, vector<1x128xf32>
    %7 = vector.broadcast %6 : vector<1x128xf32> to vector<16x128xf32>
    %8 = arith.addf %5, %7 : vector<16x128xf32>
    %c0_6 = arith.constant 0 : index
    %c0_7 = arith.constant 0 : index
    %9 = vector.load %arg9[%c0_6, %c0_7] : memref<16x128xf32, #tpu.memory_space<vmem>>, vector<16x128xf32>
    tpu.vector_store %arg9[%c0_6, %c0_7], %8 {strides = array<i32>} : memref<16x128xf32, #tpu.memory_space<vmem>>, vector<16x128xf32>,
    return
  }
  func.func @transform_0(%arg0: i32, %arg1: i32) -> (i32, i32) {
    %c0_i32 = arith.constant 0 : i32
    %c0_i32_0 = arith.constant 0 : i32
    return %arg0, %c0_i32 : i32, i32
  }
  func.func @transform_1(%arg0: i32, %arg1: i32) -> (i32, i32) {
    %c0_i32 = arith.constant 0 : i32
    %c0_i32_0 = arith.constant 0 : i32
    %c0_i32_1 = arith.constant 0 : i32
    return %c0_i32, %c0_i32_0 : i32, i32
  }
  func.func @transform_2(%arg0: i32, %arg1: i32) -> (i32, i32) {
    %c0_i32 = arith.constant 0 : i32
    %c0_i32_0 = arith.constant 0 : i32
    %c0_i32_1 = arith.constant 0 : i32
    return %c0_i32, %c0_i32_0 : i32, i32
  }
  func.func @transform_3(%arg0: i32, %arg1: i32) -> (i32, i32) {
    %c0_i32 = arith.constant 0 : i32
    %c0_i32_0 = arith.constant 0 : i32
    %c0_i32_1 = arith.constant 0 : i32
    return %c0_i32, %c0_i32_0 : i32, i32
  }
  func.func @transform_4(%arg0: i32, %arg1: i32) -> (i32, i32) {
    %c0_i32 = arith.constant 0 : i32
    %c0_i32_0 = arith.constant 0 : i32
    %c0_i32_1 = arith.constant 0 : i32
    return %c0_i32, %c0_i32_0 : i32, i32
  }
  func.func @transform_5(%arg0: i32, %arg1: i32) -> (i32, i32) {
    %c0_i32 = arith.constant 0 : i32
    %c0_i32_0 = arith.constant 0 : i32
    return %c0_i32, %arg1 : i32, i32
  }
  func.func @transform_6(%arg0: i32, %arg1: i32) -> (i32, i32) {
    %c0_i32 = arith.constant 0 : i32
    %c0_i32_0 = arith.constant 0 : i32
    return %c0_i32, %arg1 : i32, i32
  }
  func.func @transform_7(%arg0: i32, %arg1: i32) -> (i32, i32) {
    %c0_i32 = arith.constant 0 : i32
    return %arg0, %arg1 : i32, i32
  }
}

</mosaic_0001>

<llo_original>
// kernel: tpu_custom_call.1
$region0: #{tpu_custom_call.1}
  #allocation0 [shape = 'u32[]', space=smem, size = 0x4, offset = 0x4, fixed_abs, tag = 'smem constant byte address 0x4 - core index']
  #allocation1 [shape = 'u32[144,128]{1,0:T(1,128)}', space=vmem, size = 0x12000, scoped, tag = 'internal scratch']
  #allocation2 [shape = 'f32[16,128]{1,0:T(8,128)}', space=vmem, size = 0x2000, scoped, tag = 'scratch operand']
  %s0 = inlined_call_operand.hbm [shape: f32[16,128], index: 0, kind: input, shape index: {}]
  %s1 = inlined_call_operand.hbm [shape: f32[128,128], index: 1, kind: input, shape index: {}]
  %s2 = inlined_call_operand.hbm [shape: f32[1,128], index: 2, kind: input, shape index: {}]
  %s3 = inlined_call_operand.hbm [shape: f32[1,128], index: 3, kind: input, shape index: {}]
  %s4 = inlined_call_operand.hbm [shape: f32[1,128], index: 4, kind: input, shape index: {}]
  %s5 = inlined_call_operand.hbm [shape: f32[128,128], index: 5, kind: input, shape index: {}]
  %s6 = inlined_call_operand.hbm [shape: f32[1,128], index: 6, kind: input, shape index: {}]
  %s7 = inlined_call_operand.hbm [shape: f32[16,128], index: 7, kind: output, shape index: {}]
  %s8 = sld [smem:[#allocation0]]
  $region70: #{tpu_custom_call.1} parent=0
    _
  %s10 = ssub.s32 1, %s8
  %s11 = scalar_select 0, %s10, %s8
  $region1: #{tpu_custom_call.1} parent=0
    #allocation3 [shape = 'u8[8192]{0}', space=vmem, size = 0x2000, scoped, tag = 'input window, operand 0, single buffered']
    #allocation4 [shape = 's32[1]{0}', space=sflag, size = 0x4, scoped, tag = 'scoped memory for tpu_custom_call.1']
    #allocation5 [shape = 's32[1]{0}', space=sflag, size = 0x4, scoped, tag = 'scoped memory for tpu_custom_call.1']
    #allocation6 [shape = 'u8[65536]{0}', space=vmem, size = 0x10000, scoped, tag = 'input window, operand 1, single buffered']
    #allocation7 [shape = 's32[1]{0}', space=sflag, size = 0x4, scoped, tag = 'scoped memory for tpu_custom_call.1']
    #allocation8 [shape = 'u8[512]{0}', space=vmem, size = 0x400, scoped, tag = 'input window, operand 2, single buffered']
    #allocation9 [shape = 'u8[512]{0}', space=vmem, size = 0x400, scoped, tag = 'input window, operand 3, single buffered']
    #allocation10 [shape = 's32[1]{0}', space=sflag, size = 0x4, scoped, tag = 'scoped memory for tpu_custom_call.1']
    #allocation11 [shape = 'u8[512]{0}', space=vmem, size = 0x400, scoped, tag = 'input window, operand 4, single buffered']
    #allocation12 [shape = 'u8[65536]{0}', space=vmem, size = 0x10000, scoped, tag = 'input window, operand 5, single buffered']
    #allocation13 [shape = 's32[1]{0}', space=sflag, size = 0x4, scoped, tag = 'scoped memory for tpu_custom_call.1']
    #allocation14 [shape = 'u8[512]{0}', space=vmem, size = 0x400, scoped, tag = 'input window, operand 6, single buffered']
    #allocation15 [shape = 'u8[8192]{0}', space=vmem, size = 0x2000, scoped, tag = 'output window, operand 0, single buffered']
    %12 = vsyncpa [#allocation4], 0
    %13 = vsyncpa [#allocation7], 0
    %14 = vsyncpa [#allocation10], 0
    %15 = vsyncpa [#allocation13], 0
    %16 = vsyncpa [#allocation5], 0
    // Predicated region
    $region2: #{tpu_custom_call.1} parent=1 // pred_check
      _
    $region3: #{tpu_custom_call.1} parent=1 // pred_check_branch
      %18 = sbr.rel (0) target = $region5
    $region4: #{tpu_custom_call.1} parent=1 // pred_region
      %s20 = ssub.s32 256, 256
      %21 = vsyncadd [#allocation4], %s20
      %s22 = sshll.u32 [#allocation3], 4
      %s23 = int_to_ptr.vmem [resolvable:$true] %s22
      %28 = dma.hbm_to_vmem [thread:$0]  %s0, 256, %s23, [#allocation4], 128, 128, 8
    $region5: #{tpu_custom_call.1} parent=1 // pred_fallthru
      _
    // Predicated region
    $region6: #{tpu_custom_call.1} parent=1 // pred_check
      _
    $region7: #{tpu_custom_call.1} parent=1 // pred_check_branch
      %30 = sbr.rel (0) target = $region9
    $region8: #{tpu_custom_call.1} parent=1 // pred_region
      %s32 = ssub.s32 2048, 2048
      %33 = vsyncadd [#allocation7], %s32
      %s34 = sshll.u32 [#allocation6], 4
      %s35 = int_to_ptr.vmem [resolvable:$true] %s34
      %40 = dma.hbm_to_vmem [thread:$0]  %s1, 2048, %s35, [#allocation7], 128, 128, 8
    $region9: #{tpu_custom_call.1} parent=1 // pred_fallthru
      _
    // Predicated region
    $region10: #{tpu_custom_call.1} parent=1 // pred_check
      _
    $region11: #{tpu_custom_call.1} parent=1 // pred_check_branch
      %42 = sbr.rel (0) target = $region13
    $region12: #{tpu_custom_call.1} parent=1 // pred_region
      %s44 = ssub.s32 16, 16
      %45 = vsyncadd [#allocation7], %s44
      %s47 = sshll.u32 [#allocation8], 4
      %s48 = int_to_ptr.vmem [resolvable:$true] %s47
      %50 = dma.hbm_to_vmem [thread:$0]  %s2, 16, %s48, [#allocation7]
    $region13: #{tpu_custom_call.1} parent=1 // pred_fallthru
      _
    // Predicated region
    $region14: #{tpu_custom_call.1} parent=1 // pred_check
      _
    $region15: #{tpu_custom_call.1} parent=1 // pred_check_branch
      %52 = sbr.rel (0) target = $region17
    $region16: #{tpu_custom_call.1} parent=1 // pred_region
      %s54 = ssub.s32 16, 16
      %55 = vsyncadd [#allocation10], %s54
      %s57 = sshll.u32 [#allocation9], 4
      %s58 = int_to_ptr.vmem [resolvable:$true] %s57
      %60 = dma.hbm_to_vmem [thread:$0]  %s3, 16, %s58, [#allocation10]
    $region17: #{tpu_custom_call.1} parent=1 // pred_fallthru
      _
    // Predicated region
    $region18: #{tpu_custom_call.1} parent=1 // pred_check
      _
    $region19: #{tpu_custom_call.1} parent=1 // pred_check_branch
      %62 = sbr.rel (0) target = $region21
    $region20: #{tpu_custom_call.1} parent=1 // pred_region
      %s64 = ssub.s32 16, 16
      %65 = vsyncadd [#allocation10], %s64
      %s67 = sshll.u32 [#allocation11], 4
      %s68 = int_to_ptr.vmem [resolvable:$true] %s67
      %70 = dma.hbm_to_vmem [thread:$0]  %s4, 16, %s68, [#allocation10]
    $region21: #{tpu_custom_call.1} parent=1 // pred_fallthru
      _
    // Predicated region
    $region22: #{tpu_custom_call.1} parent=1 // pred_check
      _
    $region23: #{tpu_custom_call.1} parent=1 // pred_check_branch
      %72 = sbr.rel (0) target = $region25
    $region24: #{tpu_custom_call.1} parent=1 // pred_region
      %s74 = ssub.s32 2048, 2048
      %75 = vsyncadd [#allocation13], %s74
      %s76 = sshll.u32 [#allocation12], 4
      %s77 = int_to_ptr.vmem [resolvable:$true] %s76
      %82 = dma.hbm_to_vmem [thread:$0]  %s5, 2048, %s77, [#allocation13], 128, 128, 8
    $region25: #{tpu_custom_call.1} parent=1 // pred_fallthru
      _
    // Predicated region
    $region26: #{tpu_custom_call.1} parent=1 // pred_check
      _
    $region27: #{tpu_custom_call.1} parent=1 // pred_check_branch
      %84 = sbr.rel (0) target = $region29
    $region28: #{tpu_custom_call.1} parent=1 // pred_region
      %s86 = ssub.s32 16, 16
      %87 = vsyncadd [#allocation13], %s86
      %s89 = sshll.u32 [#allocation14], 4
      %s90 = int_to_ptr.vmem [resolvable:$true] %s89
      %92 = dma.hbm_to_vmem [thread:$0]  %s6, 16, %s90, [#allocation13]
    $region29: #{tpu_custom_call.1} parent=1 // pred_fallthru
      _
    // Predicated region
    $region30: #{tpu_custom_call.1} parent=1 // pred_check
      _
    $region31: #{tpu_custom_call.1} parent=1 // pred_check_branch
      %94 = sbr.rel (0) target = $region33
    $region32: #{tpu_custom_call.1} parent=1 // pred_region
      %95 = dma.done [#allocation4], 256
    $region33: #{tpu_custom_call.1} parent=1 // pred_fallthru
      _
    // Predicated region
    $region34: #{tpu_custom_call.1} parent=1 // pred_check
      _
    $region35: #{tpu_custom_call.1} parent=1 // pred_check_branch
      %97 = sbr.rel (0) target = $region37
    $region36: #{tpu_custom_call.1} parent=1 // pred_region
      %98 = dma.done [#allocation7], 2048
    $region37: #{tpu_custom_call.1} parent=1 // pred_fallthru
      _
    // Predicated region
    $region38: #{tpu_custom_call.1} parent=1 // pred_check
      _
    $region39: #{tpu_custom_call.1} parent=1 // pred_check_branch
      %100 = sbr.rel (0) target = $region41
    $region40: #{tpu_custom_call.1} parent=1 // pred_region
      %101 = dma.done [#allocation7], 16
    $region41: #{tpu_custom_call.1} parent=1 // pred_fallthru
      _
    // Predicated region
    $region42: #{tpu_custom_call.1} parent=1 // pred_check
      _
    $region43: #{tpu_custom_call.1} parent=1 // pred_check_branch
      %103 = sbr.rel (0) target = $region45
    $region44: #{tpu_custom_call.1} parent=1 // pred_region
      %104 = dma.done [#allocation10], 16
    $region45: #{tpu_custom_call.1} parent=1 // pred_fallthru
      _
    // Predicated region
    $region46: #{tpu_custom_call.1} parent=1 // pred_check
      _
    $region47: #{tpu_custom_call.1} parent=1 // pred_check_branch
      %106 = sbr.rel (0) target = $region49
    $region48: #{tpu_custom_call.1} parent=1 // pred_region
      %107 = dma.done [#allocation10], 16
    $region49: #{tpu_custom_call.1} parent=1 // pred_fallthru
      _
    // Predicated region
    $region50: #{tpu_custom_call.1} parent=1 // pred_check
      _
    $region51: #{tpu_custom_call.1} parent=1 // pred_check_branch
      %109 = sbr.rel (0) target = $region53
    $region52: #{tpu_custom_call.1} parent=1 // pred_region
      %110 = dma.done [#allocation13], 2048
    $region53: #{tpu_custom_call.1} parent=1 // pred_fallthru
      _
    // Predicated region
    $region54: #{tpu_custom_call.1} parent=1 // pred_check
      _
    $region55: #{tpu_custom_call.1} parent=1 // pred_check_branch
      %112 = sbr.rel (0) target = $region57
    $region56: #{tpu_custom_call.1} parent=1 // pred_region
      %113 = dma.done [#allocation13], 16
    $region57: #{tpu_custom_call.1} parent=1 // pred_fallthru
      _
    %p114 = scmp.eq.s32.totalorder 0, 0
    // Predicated region
    $region58: #{tpu_custom_call.1} parent=1 // pred_check
      %p115 = pneg %p114
    $region59: #{tpu_custom_call.1} parent=1 // pred_check_branch
      %117 = sbr.rel (%p115) target = $region61
    $region60: #{tpu_custom_call.1} parent=1 // pred_region
      %v118 = vld [vmem:[#allocation3] sm:$0xff]
      %v119 = vld [vmem:[#allocation3 + $0x8] sm:$0xff]
      %v120 = vld [vmem:[#allocation6] sm:$0xff]
      %v121 = vld [vmem:[#allocation6 + $0x8] sm:$0xff]
      %v122 = vld [vmem:[#allocation6 + $0x10] sm:$0xff]
      %v123 = vld [vmem:[#allocation6 + $0x18] sm:$0xff]
      %v124 = vld [vmem:[#allocation6 + $0x20] sm:$0xff]
      %v125 = vld [vmem:[#allocation6 + $0x28] sm:$0xff]
      %v126 = vld [vmem:[#allocation6 + $0x30] sm:$0xff]
      %v127 = vld [vmem:[#allocation6 + $0x38] sm:$0xff]
      %v128 = vld [vmem:[#allocation6 + $0x40] sm:$0xff]
      %v129 = vld [vmem:[#allocation6 + $0x48] sm:$0xff]
      %v130 = vld [vmem:[#allocation6 + $0x50] sm:$0xff]
      %v131 = vld [vmem:[#allocation6 + $0x58] sm:$0xff]
      %v132 = vld [vmem:[#allocation6 + $0x60] sm:$0xff]
      %v133 = vld [vmem:[#allocation6 + $0x68] sm:$0xff]
      %v134 = vld [vmem:[#allocation6 + $0x70] sm:$0xff]
      %v135 = vld [vmem:[#allocation6 + $0x78] sm:$0xff]
      %v136 = vld [vmem:[#allocation8] sm:$0x1]
      %v138 = vlaneseq
      %v139 = vshrl.u32 %v138, 7
      %v140 = vsub.s32 0, %v139
      %v141 = vrot.slane %v136, %v140
      %143 = vmatprep.subr.mxu0 0.0
      %144 = vmatpush1.msra.mxu0 %v120
      %145 = vmatprep.subr.mxu0 0.0
      %146 = vmatpush1.msra.mxu0 %v121
      %147 = vmatprep.subr.mxu0 0.0
      %148 = vmatpush1.msra.mxu0 %v122
      %149 = vmatprep.subr.mxu0 0.0
      %150 = vmatpush1.msra.mxu0 %v123
      %151 = vmatprep.subr.mxu0 0.0
      %152 = vmatpush1.msra.mxu0 %v124
      %153 = vmatprep.subr.mxu0 0.0
      %154 = vmatpush1.msra.mxu0 %v125
      %155 = vmatprep.subr.mxu0 0.0
      %156 = vmatpush1.msra.mxu0 %v126
      %157 = vmatprep.subr.mxu0 0.0
      %158 = vmatpush1.msra.mxu0 %v127
      %159 = vmatprep.subr.mxu0 0.0
      %160 = vmatpush1.msra.mxu0 %v128
      %161 = vmatprep.subr.mxu0 0.0
      %162 = vmatpush1.msra.mxu0 %v129
      %163 = vmatprep.subr.mxu0 0.0
      %164 = vmatpush1.msra.mxu0 %v130
      %165 = vmatprep.subr.mxu0 0.0
      %166 = vmatpush1.msra.mxu0 %v131
      %167 = vmatprep.subr.mxu0 0.0
      %168 = vmatpush1.msra.mxu0 %v132
      %169 = vmatprep.subr.mxu0 0.0
      %170 = vmatpush1.msra.mxu0 %v133
      %171 = vmatprep.subr.mxu0 0.0
      %172 = vmatpush1.msra.mxu0 %v134
      %173 = vmatprep.subr.mxu0 0.0
      %174 = vmatpush1.msra.mxu0 %v135
      %175 = vmatprep.subr.mxu0 0.0
      %176 = vmatpush1.msra.mxu0 0.0
      %177 = vmatprep.subr.mxu0 0.0
      %178 = vmatpush1.msra.mxu0 0.0
      %179 = vmatprep.subr.mxu0 0.0
      %180 = vmatpush1.msra.mxu0 0.0
      %181 = vmatprep.subr.mxu0 0.0
      %182 = vmatpush1.msra.mxu0 0.0
      %183 = vmatprep.subr.mxu0 0.0
      %184 = vmatpush1.msra.mxu0 0.0
      %185 = vmatprep.subr.mxu0 0.0
      %186 = vmatpush1.msra.mxu0 0.0
      %187 = vmatprep.subr.mxu0 0.0
      %188 = vmatpush1.msra.mxu0 0.0
      %189 = vmatprep.subr.mxu0 0.0
      %190 = vmatpush1.msra.mxu0 0.0
      %191 = vmatprep.subr.mxu0 0.0
      %192 = vmatpush1.msra.mxu0 0.0
      %193 = vmatprep.subr.mxu0 0.0
      %194 = vmatpush1.msra.mxu0 0.0
      %195 = vmatprep.subr.mxu0 0.0
      %196 = vmatpush1.msra.mxu0 0.0
      %197 = vmatprep.subr.mxu0 0.0
      %198 = vmatpush1.msra.mxu0 0.0
      %199 = vmatprep.subr.mxu0 0.0
      %200 = vmatpush1.msra.mxu0 0.0
      %201 = vmatprep.subr.mxu0 0.0
      %202 = vmatpush1.msra.mxu0 0.0
      %203 = vmatprep.subr.mxu0 0.0
      %204 = vmatpush1.msra.mxu0 0.0
      %205 = vmatprep.subr.mxu0 0.0
      %206 = vmatpush1.msra.mxu0 0.0
      %207 = vmatprep.mubr.f32.mxu0 0.0
      %208 = vmatmul.mubr.f32.gmra.mrb[0].mxu0 %v118
      %v209 = vpop.f32.mrb[0].mxu0
      %v210 = vadd.f32 %v141, %v209
      %v211 = vpop.f32.mrb[0].mxu0
      %212 = vmatprep.mubr.f32.mxu0 0.0
      %213 = vmatmul.mubr.f32.gmra.mrb[0].mxu0 %v119
      %v214 = vpop.f32.mrb[0].mxu0
      %v215 = vadd.f32 %v141, %v214
      %v216 = vpop.f32.mrb[0].mxu0
      %217 = vdwg.mxu0
      %v218 = vmul.f32 %v210, 0.5
      %v219 = vmul.f32 %v215, 0.5
      %v220 = vmul.f32 %v210, 0.044715
      %v221 = vmul.f32 %v215, 0.044715
      %v222 = vmul.f32 %v220, %v210
      %v223 = vmul.f32 %v221, %v215
      %v224 = vmul.f32 %v222, %v210
      %v225 = vmul.f32 %v223, %v215
      %v226 = vadd.f32 %v210, %v224
      %v227 = vadd.f32 %v215, %v225
      %v228 = vmul.f32 %v226, 0.7978846
      %v229 = vmul.f32 %v227, 0.7978846
      %v230 = vtanh.pop %v228
      %v231 = vtanh.pop %v229
      %v232 = vadd.f32 %v230, 1.0
      %v233 = vadd.f32 %v231, 1.0
      %v234 = vmul.f32 %v218, %v232
      %v235 = vmul.f32 %v219, %v233
      %236 = vadd.xlane.f32.xlu0 %v234
      %v237 = vpop.xlane.xlu0 %236
      %238 = vadd.xlane.f32.xlu0 %v235
      %v239 = vpop.xlane.xlu0 %238
      %v240 = vmul.f32 %v237, 0.03125
      %v241 = vmul.f32 %v239, 0.03125
      %v242 = vlaneseq
      %v243 = vand.u32 %v242, 127
      %vm244 = vcmp.lt.s32.totalorder %v243, 32
      %v245 = vsub.f32 %v234, %v240
      %v246 = vsub.f32 %v235, %v241
      %v247 = vsel %vm244, %v245, 0.0
      %v248 = vsel %vm244, %v246, 0.0
      %v249 = vmul.f32 %v247, %v247
      %v250 = vmul.f32 %v248, %v248
      %251 = vadd.xlane.f32.xlu0 %v249
      %v252 = vpop.xlane.xlu0 %251
      %253 = vadd.xlane.f32.xlu0 %v250
      %v254 = vpop.xlane.xlu0 %253
      %v255 = vmul.f32 %v252, 0.03125
      %v256 = vmul.f32 %v254, 0.03125
      %v257 = vadd.f32 %v255, 1e-12
      %v258 = vadd.f32 %v256, 1e-12
      %v259 = vrsqrt.pop %v257
      %v260 = vrsqrt.pop %v258
      %v261 = vmul.f32 %v245, %v259
      %v262 = vmul.f32 %v246, %v260
      %v263 = vld [vmem:[#allocation9] sm:$0x1]
      %v265 = vlaneseq
      %v266 = vshrl.u32 %v265, 7
      %v267 = vsub.s32 0, %v266
      %v268 = vrot.slane %v263, %v267
      %v270 = vmul.f32 %v261, %v268
      %v271 = vmul.f32 %v262, %v268
      %v272 = vld [vmem:[#allocation11] sm:$0x1]
      %v274 = vlaneseq
      %v275 = vshrl.u32 %v274, 7
      %v276 = vsub.s32 0, %v275
      %v277 = vrot.slane %v272, %v276
      %v279 = vadd.f32 %v270, %v277
      %v280 = vadd.f32 %v271, %v277
      %281 = vst [vmem:[#allocation2] sm:$0xff] %v279
      %282 = vst [vmem:[#allocation2 + $0x8] sm:$0xff] %v280
    $region61: #{tpu_custom_call.1} parent=1 // pred_fallthru
      _
    %v283 = vld [vmem:[#allocation2] sm:$0xff]
    %v284 = vld [vmem:[#allocation2 + $0x8] sm:$0xff]
    %v285 = vld [vmem:[#allocation12] sm:$0xff]
    %v286 = vld [vmem:[#allocation12 + $0x8] sm:$0xff]
    %v287 = vld [vmem:[#allocation12 + $0x10] sm:$0xff]
    %v288 = vld [vmem:[#allocation12 + $0x18] sm:$0xff]
    %v289 = vld [vmem:[#allocation12 + $0x20] sm:$0xff]
    %v290 = vld [vmem:[#allocation12 + $0x28] sm:$0xff]
    %v291 = vld [vmem:[#allocation12 + $0x30] sm:$0xff]
    %v292 = vld [vmem:[#allocation12 + $0x38] sm:$0xff]
    %v293 = vld [vmem:[#allocation12 + $0x40] sm:$0xff]
    %v294 = vld [vmem:[#allocation12 + $0x48] sm:$0xff]
    %v295 = vld [vmem:[#allocation12 + $0x50] sm:$0xff]
    %v296 = vld [vmem:[#allocation12 + $0x58] sm:$0xff]
    %v297 = vld [vmem:[#allocation12 + $0x60] sm:$0xff]
    %v298 = vld [vmem:[#allocation12 + $0x68] sm:$0xff]
    %v299 = vld [vmem:[#allocation12 + $0x70] sm:$0xff]
    %v300 = vld [vmem:[#allocation12 + $0x78] sm:$0xff]
    %v301 = vld [vmem:[#allocation14] sm:$0x1]
    %v303 = vlaneseq
    %v304 = vshrl.u32 %v303, 7
    %v305 = vsub.s32 0, %v304
    %v306 = vrot.slane %v301, %v305
    %308 = vmatprep.subr.mxu0 0.0
    %309 = vmatpush1.msra.mxu0 %v285
    %310 = vmatprep.subr.mxu0 0.0
    %311 = vmatpush1.msra.mxu0 %v286
    %312 = vmatprep.subr.mxu0 0.0
    %313 = vmatpush1.msra.mxu0 %v287
    %314 = vmatprep.subr.mxu0 0.0
    %315 = vmatpush1.msra.mxu0 %v288
    %316 = vmatprep.subr.mxu0 0.0
    %317 = vmatpush1.msra.mxu0 %v289
    %318 = vmatprep.subr.mxu0 0.0
    %319 = vmatpush1.msra.mxu0 %v290
    %320 = vmatprep.subr.mxu0 0.0
    %321 = vmatpush1.msra.mxu0 %v291
    %322 = vmatprep.subr.mxu0 0.0
    %323 = vmatpush1.msra.mxu0 %v292
    %324 = vmatprep.subr.mxu0 0.0
    %325 = vmatpush1.msra.mxu0 %v293
    %326 = vmatprep.subr.mxu0 0.0
    %327 = vmatpush1.msra.mxu0 %v294
    %328 = vmatprep.subr.mxu0 0.0
    %329 = vmatpush1.msra.mxu0 %v295
    %330 = vmatprep.subr.mxu0 0.0
    %331 = vmatpush1.msra.mxu0 %v296
    %332 = vmatprep.subr.mxu0 0.0
    %333 = vmatpush1.msra.mxu0 %v297
    %334 = vmatprep.subr.mxu0 0.0
    %335 = vmatpush1.msra.mxu0 %v298
    %336 = vmatprep.subr.mxu0 0.0
    %337 = vmatpush1.msra.mxu0 %v299
    %338 = vmatprep.subr.mxu0 0.0
    %339 = vmatpush1.msra.mxu0 %v300
    %340 = vmatprep.subr.mxu0 0.0
    %341 = vmatpush1.msra.mxu0 0.0
    %342 = vmatprep.subr.mxu0 0.0
    %343 = vmatpush1.msra.mxu0 0.0
    %344 = vmatprep.subr.mxu0 0.0
    %345 = vmatpush1.msra.mxu0 0.0
    %346 = vmatprep.subr.mxu0 0.0
    %347 = vmatpush1.msra.mxu0 0.0
    %348 = vmatprep.subr.mxu0 0.0
    %349 = vmatpush1.msra.mxu0 0.0
    %350 = vmatprep.subr.mxu0 0.0
    %351 = vmatpush1.msra.mxu0 0.0
    %352 = vmatprep.subr.mxu0 0.0
    %353 = vmatpush1.msra.mxu0 0.0
    %354 = vmatprep.subr.mxu0 0.0
    %355 = vmatpush1.msra.mxu0 0.0
    %356 = vmatprep.subr.mxu0 0.0
    %357 = vmatpush1.msra.mxu0 0.0
    %358 = vmatprep.subr.mxu0 0.0
    %359 = vmatpush1.msra.mxu0 0.0
    %360 = vmatprep.subr.mxu0 0.0
    %361 = vmatpush1.msra.mxu0 0.0
    %362 = vmatprep.subr.mxu0 0.0
    %363 = vmatpush1.msra.mxu0 0.0
    %364 = vmatprep.subr.mxu0 0.0
    %365 = vmatpush1.msra.mxu0 0.0
    %366 = vmatprep.subr.mxu0 0.0
    %367 = vmatpush1.msra.mxu0 0.0
    %368 = vmatprep.subr.mxu0 0.0
    %369 = vmatpush1.msra.mxu0 0.0
    %370 = vmatprep.subr.mxu0 0.0
    %371 = vmatpush1.msra.mxu0 0.0
    %372 = vmatprep.mubr.f32.mxu0 0.0
    %373 = vmatmul.mubr.f32.gmra.mrb[0].mxu0 %v283
    %v374 = vpop.f32.mrb[0].mxu0
    %v375 = vadd.f32 %v306, %v374
    %v376 = vpop.f32.mrb[0].mxu0
    %377 = vmatprep.mubr.f32.mxu0 0.0
    %378 = vmatmul.mubr.f32.gmra.mrb[0].mxu0 %v284
    %v379 = vpop.f32.mrb[0].mxu0
    %v380 = vadd.f32 %v306, %v379
    %v381 = vpop.f32.mrb[0].mxu0
    %382 = vdwg.mxu0
    %383 = vst [vmem:[#allocation15] sm:$0xff] %v375
    %384 = vst [vmem:[#allocation15 + $0x8] sm:$0xff] %v380
    // Predicated region
    $region62: #{tpu_custom_call.1} parent=1 // pred_check
      _
    $region63: #{tpu_custom_call.1} parent=1 // pred_check_branch
      %386 = sbr.rel (0) target = $region65
    $region64: #{tpu_custom_call.1} parent=1 // pred_region
      %s388 = ssub.s32 256, 256
      %389 = vsyncadd [#allocation5], %s388
      %s390 = sshll.u32 [#allocation15], 4
      %s391 = int_to_ptr.vmem [resolvable:$true] %s390
      %396 = dma.vmem_to_hbm [thread:$0]  %s391, 256, %s7, [#allocation5], 128, 128, 8
    $region65: #{tpu_custom_call.1} parent=1 // pred_fallthru
      _
    // Predicated region
    $region66: #{tpu_custom_call.1} parent=1 // pred_check
      _
    $region67: #{tpu_custom_call.1} parent=1 // pred_check_branch
      %398 = sbr.rel (0) target = $region69
    $region68: #{tpu_custom_call.1} parent=1 // pred_region
      %399 = dma.done [#allocation5], 256
    $region69: #{tpu_custom_call.1} parent=1 // pred_fallthru
      _
    %400 = vsyncpa [#allocation4], 1
    %401 = vsyncpa [#allocation7], 1
    %402 = vsyncpa [#allocation10], 1
    %403 = vsyncpa [#allocation13], 1
    %404 = vsyncpa [#allocation5], 1

</llo_original>
